<compile_context>
chip_gen: v6e
topology: v6e:2x2x1
jax: 0.10.0
libtpu: 0.0.40
codegen_flags: <defaults>
</compile_context>

<pallas_src>
import functools

import jax
import jax.numpy as jnp
import numpy as np
from jax.experimental import pallas as pl
from jax.experimental.pallas import tpu as pltpu


def _gru_recurrence_kernel(gi_ref, w_hh_ref, b_hn_ref, out_ref, *,
                           seq_len, batch, hidden_size):
    """Serial GRU recurrence over the whole sequence; everything VMEM-resident, no grid.

    gi_ref : (T, B, 3H) f32  fused input-side pre-activations, columns (r|z|n):
                 gi[..., :H]   = X@W_ir^T + b_ir + b_hr
                 gi[..., H:2H] = X@W_iz^T + b_iz + b_hz
                 gi[..., 2H:]  = X@W_in^T + b_in
    w_hh_ref: (H, 3H) bf16   fused recurrent weights, right-multiply form, cols (r|z|n)
    b_hn_ref: (1, H)  f32    recurrent bias of the n gate (stays inside the r-gating)
    out_ref : (T, B, H)      full sequence of hidden states
    """
    T, B, H = seq_len, batch, hidden_size
    H2 = 2 * H

    # Loop-invariant load / broadcast hoisted out of the serial chain
    # (JAX does not CSE broadcast_in_dim inside loops).
    w_hh = w_hh_ref[...]                                    # (H, 3H) bf16
    b_hn = jnp.broadcast_to(b_hn_ref[...], (B, H))          # (B, H)  f32

    def step(t, h):
        # One fused (B,H)@(H,3H) MXU matmul per step, f32 accumulation.
        gh = jnp.dot(h.astype(jnp.bfloat16), w_hh,
                     preferred_element_type=jnp.float32)    # (B, 3H)
        gi_t = gi_ref[t]                                    # (B, 3H), one VMEM load
        # One EUP push covers both r and z (adjacent lanes 0..2H).
        rz = jax.nn.sigmoid(gi_t[:, :H2] + gh[:, :H2])      # (B, 2H)
        r = rz[:, :H]
        z = rz[:, H:]
        n = jnp.tanh(gi_t[:, H2:] + r * (gh[:, H2:] + b_hn))
        h_new = n + z * (h - n)                             # == (1-z)*n + z*h
        out_ref[t] = h_new.astype(out_ref.dtype)            # single store per step
        return h_new

    h0 = jnp.zeros((B, H), jnp.float32)                     # zero-initialized hidden
    unroll = True if T <= 16 else 8                         # partial unroll for long T
    jax.lax.fori_loop(0, T, step, h0, unroll=unroll)


@jax.jit
def gru_forward(x, weight_ih, weight_hh, bias_ih, bias_hh):
    """x: (T, B, I) f32.  Weights in native PyTorch nn.GRU layout, gate order (r, z, n)."""
    T, B, I = x.shape
    H = weight_hh.shape[1]
    H2 = 2 * H

    # ---- Hoisted input projection: ONE batched bf16 MXU matmul over all T*B rows plus
    # ONE fused bias add containing every bias that sits outside the r-gating.
    b_gi = bias_ih + jnp.concatenate(
        [bias_hh[:H2], jnp.zeros((H,), bias_hh.dtype)])     # (3H,) = (b_ir+b_hr, b_iz+b_hz, b_in)
    gi = jnp.einsum("tbi,hi->tbh",
                    x.astype(jnp.bfloat16), weight_ih.astype(jnp.bfloat16),
                    preferred_element_type=jnp.float32) + b_gi   # (T, B, 3H) f32

    # Fused recurrent weight (right-multiply form), bf16 for the MXU; n-gate bias kept
    # separate because it sits inside the r-gating.
    w_hh_f = weight_hh.T.astype(jnp.bfloat16)               # (H, 3H), cols (r|z|n)
    b_hn = bias_hh[H2:].reshape(1, H)                       # (1, H)

    kernel = functools.partial(_gru_recurrence_kernel,
                               seq_len=T, batch=B, hidden_size=H)
    vmem = pl.BlockSpec(memory_space=pltpu.MemorySpace.VMEM)
    # Whole sequence VMEM-resident, no grid => single-buffered invariants, one HBM
    # writeback for the full output instead of a tiny masked store per step.
    return pl.pallas_call(
        kernel,
        out_shape=jax.ShapeDtypeStruct((T, B, H), x.dtype),
        in_specs=[vmem, vmem, vmem],
        out_specs=vmem,
    )(gi, w_hh_f, b_hn)


def gru_reference(x, weight_ih, weight_hh, bias_ih, bias_hh):
    """Pure-JAX reference with PyTorch GRU semantics (gate order r,z,n) and the same
    precision policy as the kernel (bf16 matmul operands, f32 accumulation)."""
    T, B, I = x.shape
    H = weight_hh.shape[1]
    w_ih_t = weight_ih.T.astype(jnp.bfloat16)               # (I, 3H)
    w_hh_t = weight_hh.T.astype(jnp.bfloat16)               # (H, 3H)

    def step(h, x_t):
        gi = jnp.dot(x_t.astype(jnp.bfloat16), w_ih_t,
                     preferred_element_type=jnp.float32) + bias_ih
        gh = jnp.dot(h.astype(jnp.bfloat16), w_hh_t,
                     preferred_element_type=jnp.float32) + bias_hh
        i_r, i_z, i_n = gi[:, :H], gi[:, H:2 * H], gi[:, 2 * H:]
        h_r, h_z, h_n = gh[:, :H], gh[:, H:2 * H], gh[:, 2 * H:]
        r = jax.nn.sigmoid(i_r + h_r)
        z = jax.nn.sigmoid(i_z + h_z)
        n = jnp.tanh(i_n + r * h_n)
        h_new = (1.0 - z) * n + z * h
        return h_new, h_new

    h0 = jnp.zeros((B, H), jnp.float32)
    _, outs = jax.lax.scan(step, h0, x)
    return outs


if __name__ == "__main__":
    # Shapes implied by the module: X is (seq_len, batch, input_size).
    seq_len, batch, input_size, hidden_size = 8, 2, 16, 32

    key = jax.random.PRNGKey(0)
    k_x, k_wih, k_whh, k_bih, k_bhh = jax.random.split(key, 5)

    # PyTorch GRU-style uniform(-1/sqrt(H), 1/sqrt(H)) init, native PyTorch layout.
    bound = 1.0 / np.sqrt(hidden_size)
    x = jax.random.normal(k_x, (seq_len, batch, input_size), dtype=jnp.float32)
    weight_ih = jax.random.uniform(k_wih, (3 * hidden_size, input_size),
                                   minval=-bound, maxval=bound, dtype=jnp.float32)
    weight_hh = jax.random.uniform(k_whh, (3 * hidden_size, hidden_size),
                                   minval=-bound, maxval=bound, dtype=jnp.float32)
    bias_ih = jax.random.uniform(k_bih, (3 * hidden_size,),
                                 minval=-bound, maxval=bound, dtype=jnp.float32)
    bias_hh = jax.random.uniform(k_bhh, (3 * hidden_size,),
                                 minval=-bound, maxval=bound, dtype=jnp.float32)

    out = jax.block_until_ready(gru_forward(x, weight_ih, weight_hh, bias_ih, bias_hh))
    ref = jax.block_until_ready(gru_reference(x, weight_ih, weight_hh, bias_ih, bias_hh))

    # bf16 matmul operands (f32 accumulation) on both sides; tolerance covers the tiny
    # accumulation-order / bias-folding rounding differences.
    np.testing.assert_allclose(np.asarray(out), np.asarray(ref), rtol=2e-3, atol=2e-3)

    print("KERNEL_OK")
</pallas_src>

<mosaic_0001>
module attributes {stable_mosaic.version = 11 : i64} {
  func.func @_gru_recurrence_kernel(%arg0: memref<8x2x96xf32, #tpu.memory_space<vmem>>, %arg1: memref<32x96xbf16, #tpu.memory_space<vmem>>, %arg2: memref<1x32xf32, #tpu.memory_space<vmem>>, %arg3: memref<8x2x32xf32, #tpu.memory_space<vmem>>) attributes {dimension_semantics = [], scalar_prefetch = 0 : i64, scratch_operands = 0 : i64, tpu.core_type = #tpu.core_type<tc>} {
    %c0 = arith.constant 0 : index
    %c0_0 = arith.constant 0 : index
    %0 = vector.load %arg1[%c0, %c0_0] : memref<32x96xbf16, #tpu.memory_space<vmem>>, vector<32x96xbf16>
    %c0_1 = arith.constant 0 : index
    %c0_2 = arith.constant 0 : index
    %1 = vector.load %arg2[%c0_1, %c0_2] : memref<1x32xf32, #tpu.memory_space<vmem>>, vector<1x32xf32>
    %2 = vector.shape_cast %1 : vector<1x32xf32> to vector<1x32xf32>
    %3 = vector.broadcast %2 : vector<1x32xf32> to vector<2x32xf32>
    %cst = arith.constant 0.000000e+00 : f32
    %4 = vector.broadcast %cst : f32 to vector<2x32xf32>
    %c0_i32 = arith.constant 0 : i32
    %5 = arith.truncf %4 : vector<2x32xf32> to vector<2x32xbf16>
    %cst_3 = arith.constant dense<0.000000e+00> : vector<2x96xf32>
    %6 = tpu.matmul %5, %0, %cst_3 {dimension_numbers = #tpu.dot_dimension_numbers<[1], [0], [0], [1], [0, 0, 1, 1], [], []>} : vector<2x32xbf16>, vector<32x96xbf16>, vector<2x96xf32> -> vector<2x96xf32>
    %7 = arith.index_cast %c0_i32 : i32 to index
    %c0_4 = arith.constant 0 : index
    %c0_5 = arith.constant 0 : index
    %8 = vector.load %arg0[%7, %c0_4, %c0_5] : memref<8x2x96xf32, #tpu.memory_space<vmem>>, vector<1x2x96xf32>
    %9 = vector.shape_cast %8 : vector<1x2x96xf32> to vector<2x96xf32>
    %10 = vector.extract_strided_slice %9 {offsets = [0, 0], sizes = [2, 64], strides = [1, 1]} : vector<2x96xf32> to vector<2x64xf32>
    %11 = vector.extract_strided_slice %6 {offsets = [0, 0], sizes = [2, 64], strides = [1, 1]} : vector<2x96xf32> to vector<2x64xf32>
    %12 = arith.addf %10, %11 : vector<2x64xf32>
    %13 = arith.negf %12 : vector<2x64xf32>
    %14 = math.exp %13 : vector<2x64xf32>
    %cst_6 = arith.constant 1.000000e+00 : f32
    %15 = vector.broadcast %cst_6 : f32 to vector<2x64xf32>
    %16 = arith.addf %15, %14 : vector<2x64xf32>
    %17 = arith.divf %15, %16 : vector<2x64xf32>
    %18 = vector.extract_strided_slice %17 {offsets = [0, 0], sizes = [2, 32], strides = [1, 1]} : vector<2x64xf32> to vector<2x32xf32>
    %19 = vector.extract_strided_slice %17 {offsets = [0, 32], sizes = [2, 32], strides = [1, 1]} : vector<2x64xf32> to vector<2x32xf32>
    %20 = vector.extract_strided_slice %9 {offsets = [0, 64], sizes = [2, 32], strides = [1, 1]} : vector<2x96xf32> to vector<2x32xf32>
    %21 = vector.extract_strided_slice %6 {offsets = [0, 64], sizes = [2, 32], strides = [1, 1]} : vector<2x96xf32> to vector<2x32xf32>
    %22 = arith.addf %21, %3 : vector<2x32xf32>
    %23 = arith.mulf %18, %22 : vector<2x32xf32>
    %24 = arith.addf %20, %23 : vector<2x32xf32>
    %25 = math.tanh %24 : vector<2x32xf32>
    %26 = arith.subf %4, %25 : vector<2x32xf32>
    %27 = arith.mulf %19, %26 : vector<2x32xf32>
    %28 = arith.addf %25, %27 : vector<2x32xf32>
    %29 = arith.index_cast %c0_i32 : i32 to index
    %c0_7 = arith.constant 0 : index
    %c0_8 = arith.constant 0 : index
    %30 = vector.load %arg3[%29, %c0_7, %c0_8] : memref<8x2x32xf32, #tpu.memory_space<vmem>>, vector<1x2x32xf32>
    %31 = vector.shape_cast %30 : vector<1x2x32xf32> to vector<2x32xf32>
    %32 = vector.shape_cast %28 : vector<2x32xf32> to vector<1x2x32xf32>
    tpu.vector_store %arg3[%29, %c0_7, %c0_8], %32 {strides = array<i32>} : memref<8x2x32xf32, #tpu.memory_space<vmem>>, vector<1x2x32xf32>,
    %c1_i32 = arith.constant 1 : i32
    %33 = arith.truncf %28 : vector<2x32xf32> to vector<2x32xbf16>
    %cst_9 = arith.constant dense<0.000000e+00> : vector<2x96xf32>
    %34 = tpu.matmul %33, %0, %cst_9 {dimension_numbers = #tpu.dot_dimension_numbers<[1], [0], [0], [1], [0, 0, 1, 1], [], []>} : vector<2x32xbf16>, vector<32x96xbf16>, vector<2x96xf32> -> vector<2x96xf32>
    %35 = arith.index_cast %c1_i32 : i32 to index
    %c0_10 = arith.constant 0 : index
    %c0_11 = arith.constant 0 : index
    %36 = vector.load %arg0[%35, %c0_10, %c0_11] : memref<8x2x96xf32, #tpu.memory_space<vmem>>, vector<1x2x96xf32>
    %37 = vector.shape_cast %36 : vector<1x2x96xf32> to vector<2x96xf32>
    %38 = vector.extract_strided_slice %37 {offsets = [0, 0], sizes = [2, 64], strides = [1, 1]} : vector<2x96xf32> to vector<2x64xf32>
    %39 = vector.extract_strided_slice %34 {offsets = [0, 0], sizes = [2, 64], strides = [1, 1]} : vector<2x96xf32> to vector<2x64xf32>
    %40 = arith.addf %38, %39 : vector<2x64xf32>
    %41 = arith.negf %40 : vector<2x64xf32>
    %42 = math.exp %41 : vector<2x64xf32>
    %cst_12 = arith.constant 1.000000e+00 : f32
    %43 = vector.broadcast %cst_12 : f32 to vector<2x64xf32>
    %44 = arith.addf %43, %42 : vector<2x64xf32>
    %45 = arith.divf %43, %44 : vector<2x64xf32>
    %46 = vector.extract_strided_slice %45 {offsets = [0, 0], sizes = [2, 32], strides = [1, 1]} : vector<2x64xf32> to vector<2x32xf32>
    %47 = vector.extract_strided_slice %45 {offsets = [0, 32], sizes = [2, 32], strides = [1, 1]} : vector<2x64xf32> to vector<2x32xf32>
    %48 = vector.extract_strided_slice %37 {offsets = [0, 64], sizes = [2, 32], strides = [1, 1]} : vector<2x96xf32> to vector<2x32xf32>
    %49 = vector.extract_strided_slice %34 {offsets = [0, 64], sizes = [2, 32], strides = [1, 1]} : vector<2x96xf32> to vector<2x32xf32>
    %50 = arith.addf %49, %3 : vector<2x32xf32>
    %51 = arith.mulf %46, %50 : vector<2x32xf32>
    %52 = arith.addf %48, %51 : vector<2x32xf32>
    %53 = math.tanh %52 : vector<2x32xf32>
    %54 = arith.subf %28, %53 : vector<2x32xf32>
    %55 = arith.mulf %47, %54 : vector<2x32xf32>
    %56 = arith.addf %53, %55 : vector<2x32xf32>
    %57 = arith.index_cast %c1_i32 : i32 to index
    %c0_13 = arith.constant 0 : index
    %c0_14 = arith.constant 0 : index
    %58 = vector.load %arg3[%57, %c0_13, %c0_14] : memref<8x2x32xf32, #tpu.memory_space<vmem>>, vector<1x2x32xf32>
    %59 = vector.shape_cast %58 : vector<1x2x32xf32> to vector<2x32xf32>
    %60 = vector.shape_cast %56 : vector<2x32xf32> to vector<1x2x32xf32>
    tpu.vector_store %arg3[%57, %c0_13, %c0_14], %60 {strides = array<i32>} : memref<8x2x32xf32, #tpu.memory_space<vmem>>, vector<1x2x32xf32>,
    %c2_i32 = arith.constant 2 : i32
    %61 = arith.truncf %56 : vector<2x32xf32> to vector<2x32xbf16>
    %cst_15 = arith.constant dense<0.000000e+00> : vector<2x96xf32>
    %62 = tpu.matmul %61, %0, %cst_15 {dimension_numbers = #tpu.dot_dimension_numbers<[1], [0], [0], [1], [0, 0, 1, 1], [], []>} : vector<2x32xbf16>, vector<32x96xbf16>, vector<2x96xf32> -> vector<2x96xf32>
    %63 = arith.index_cast %c2_i32 : i32 to index
    %c0_16 = arith.constant 0 : index
    %c0_17 = arith.constant 0 : index
    %64 = vector.load %arg0[%63, %c0_16, %c0_17] : memref<8x2x96xf32, #tpu.memory_space<vmem>>, vector<1x2x96xf32>
    %65 = vector.shape_cast %64 : vector<1x2x96xf32> to vector<2x96xf32>
    %66 = vector.extract_strided_slice %65 {offsets = [0, 0], sizes = [2, 64], strides = [1, 1]} : vector<2x96xf32> to vector<2x64xf32>
    %67 = vector.extract_strided_slice %62 {offsets = [0, 0], sizes = [2, 64], strides = [1, 1]} : vector<2x96xf32> to vector<2x64xf32>
    %68 = arith.addf %66, %67 : vector<2x64xf32>
    %69 = arith.negf %68 : vector<2x64xf32>
    %70 = math.exp %69 : vector<2x64xf32>
    %cst_18 = arith.constant 1.000000e+00 : f32
    %71 = vector.broadcast %cst_18 : f32 to vector<2x64xf32>
    %72 = arith.addf %71, %70 : vector<2x64xf32>
    %73 = arith.divf %71, %72 : vector<2x64xf32>
    %74 = vector.extract_strided_slice %73 {offsets = [0, 0], sizes = [2, 32], strides = [1, 1]} : vector<2x64xf32> to vector<2x32xf32>
    %75 = vector.extract_strided_slice %73 {offsets = [0, 32], sizes = [2, 32], strides = [1, 1]} : vector<2x64xf32> to vector<2x32xf32>
    %76 = vector.extract_strided_slice %65 {offsets = [0, 64], sizes = [2, 32], strides = [1, 1]} : vector<2x96xf32> to vector<2x32xf32>
    %77 = vector.extract_strided_slice %62 {offsets = [0, 64], sizes = [2, 32], strides = [1, 1]} : vector<2x96xf32> to vector<2x32xf32>
    %78 = arith.addf %77, %3 : vector<2x32xf32>
    %79 = arith.mulf %74, %78 : vector<2x32xf32>
    %80 = arith.addf %76, %79 : vector<2x32xf32>
    %81 = math.tanh %80 : vector<2x32xf32>
    %82 = arith.subf %56, %81 : vector<2x32xf32>
    %83 = arith.mulf %75, %82 : vector<2x32xf32>
    %84 = arith.addf %81, %83 : vector<2x32xf32>
    %85 = arith.index_cast %c2_i32 : i32 to index
    %c0_19 = arith.constant 0 : index
    %c0_20 = arith.constant 0 : index
    %86 = vector.load %arg3[%85, %c0_19, %c0_20] : memref<8x2x32xf32, #tpu.memory_space<vmem>>, vector<1x2x32xf32>
    %87 = vector.shape_cast %86 : vector<1x2x32xf32> to vector<2x32xf32>
    %88 = vector.shape_cast %84 : vector<2x32xf32> to vector<1x2x32xf32>
    tpu.vector_store %arg3[%85, %c0_19, %c0_20], %88 {strides = array<i32>} : memref<8x2x32xf32, #tpu.memory_space<vmem>>, vector<1x2x32xf32>,
    %c3_i32 = arith.constant 3 : i32
    %89 = arith.truncf %84 : vector<2x32xf32> to vector<2x32xbf16>
    %cst_21 = arith.constant dense<0.000000e+00> : vector<2x96xf32>
    %90 = tpu.matmul %89, %0, %cst_21 {dimension_numbers = #tpu.dot_dimension_numbers<[1], [0], [0], [1], [0, 0, 1, 1], [], []>} : vector<2x32xbf16>, vector<32x96xbf16>, vector<2x96xf32> -> vector<2x96xf32>
    %91 = arith.index_cast %c3_i32 : i32 to index
    %c0_22 = arith.constant 0 : index
    %c0_23 = arith.constant 0 : index
    %92 = vector.load %arg0[%91, %c0_22, %c0_23] : memref<8x2x96xf32, #tpu.memory_space<vmem>>, vector<1x2x96xf32>
    %93 = vector.shape_cast %92 : vector<1x2x96xf32> to vector<2x96xf32>
    %94 = vector.extract_strided_slice %93 {offsets = [0, 0], sizes = [2, 64], strides = [1, 1]} : vector<2x96xf32> to vector<2x64xf32>
    %95 = vector.extract_strided_slice %90 {offsets = [0, 0], sizes = [2, 64], strides = [1, 1]} : vector<2x96xf32> to vector<2x64xf32>
    %96 = arith.addf %94, %95 : vector<2x64xf32>
    %97 = arith.negf %96 : vector<2x64xf32>
    %98 = math.exp %97 : vector<2x64xf32>
    %cst_24 = arith.constant 1.000000e+00 : f32
    %99 = vector.broadcast %cst_24 : f32 to vector<2x64xf32>
    %100 = arith.addf %99, %98 : vector<2x64xf32>
    %101 = arith.divf %99, %100 : vector<2x64xf32>
    %102 = vector.extract_strided_slice %101 {offsets = [0, 0], sizes = [2, 32], strides = [1, 1]} : vector<2x64xf32> to vector<2x32xf32>
    %103 = vector.extract_strided_slice %101 {offsets = [0, 32], sizes = [2, 32], strides = [1, 1]} : vector<2x64xf32> to vector<2x32xf32>
    %104 = vector.extract_strided_slice %93 {offsets = [0, 64], sizes = [2, 32], strides = [1, 1]} : vector<2x96xf32> to vector<2x32xf32>
    %105 = vector.extract_strided_slice %90 {offsets = [0, 64], sizes = [2, 32], strides = [1, 1]} : vector<2x96xf32> to vector<2x32xf32>
    %106 = arith.addf %105, %3 : vector<2x32xf32>
    %107 = arith.mulf %102, %106 : vector<2x32xf32>
    %108 = arith.addf %104, %107 : vector<2x32xf32>
    %109 = math.tanh %108 : vector<2x32xf32>
    %110 = arith.subf %84, %109 : vector<2x32xf32>
    %111 = arith.mulf %103, %110 : vector<2x32xf32>
    %112 = arith.addf %109, %111 : vector<2x32xf32>
    %113 = arith.index_cast %c3_i32 : i32 to index
    %c0_25 = arith.constant 0 : index
    %c0_26 = arith.constant 0 : index
    %114 = vector.load %arg3[%113, %c0_25, %c0_26] : memref<8x2x32xf32, #tpu.memory_space<vmem>>, vector<1x2x32xf32>
    %115 = vector.shape_cast %114 : vector<1x2x32xf32> to vector<2x32xf32>
    %116 = vector.shape_cast %112 : vector<2x32xf32> to vector<1x2x32xf32>
    tpu.vector_store %arg3[%113, %c0_25, %c0_26], %116 {strides = array<i32>} : memref<8x2x32xf32, #tpu.memory_space<vmem>>, vector<1x2x32xf32>,
    %c4_i32 = arith.constant 4 : i32
    %117 = arith.truncf %112 : vector<2x32xf32> to vector<2x32xbf16>
    %cst_27 = arith.constant dense<0.000000e+00> : vector<2x96xf32>
    %118 = tpu.matmul %117, %0, %cst_27 {dimension_numbers = #tpu.dot_dimension_numbers<[1], [0], [0], [1], [0, 0, 1, 1], [], []>} : vector<2x32xbf16>, vector<32x96xbf16>, vector<2x96xf32> -> vector<2x96xf32>
    %119 = arith.index_cast %c4_i32 : i32 to index
    %c0_28 = arith.constant 0 : index
    %c0_29 = arith.constant 0 : index
    %120 = vector.load %arg0[%119, %c0_28, %c0_29] : memref<8x2x96xf32, #tpu.memory_space<vmem>>, vector<1x2x96xf32>
    %121 = vector.shape_cast %120 : vector<1x2x96xf32> to vector<2x96xf32>
    %122 = vector.extract_strided_slice %121 {offsets = [0, 0], sizes = [2, 64], strides = [1, 1]} : vector<2x96xf32> to vector<2x64xf32>
    %123 = vector.extract_strided_slice %118 {offsets = [0, 0], sizes = [2, 64], strides = [1, 1]} : vector<2x96xf32> to vector<2x64xf32>
    %124 = arith.addf %122, %123 : vector<2x64xf32>
    %125 = arith.negf %124 : vector<2x64xf32>
    %126 = math.exp %125 : vector<2x64xf32>
    %cst_30 = arith.constant 1.000000e+00 : f32
    %127 = vector.broadcast %cst_30 : f32 to vector<2x64xf32>
    %128 = arith.addf %127, %126 : vector<2x64xf32>
    %129 = arith.divf %127, %128 : vector<2x64xf32>
    %130 = vector.extract_strided_slice %129 {offsets = [0, 0], sizes = [2, 32], strides = [1, 1]} : vector<2x64xf32> to vector<2x32xf32>
    %131 = vector.extract_strided_slice %129 {offsets = [0, 32], sizes = [2, 32], strides = [1, 1]} : vector<2x64xf32> to vector<2x32xf32>
    %132 = vector.extract_strided_slice %121 {offsets = [0, 64], sizes = [2, 32], strides = [1, 1]} : vector<2x96xf32> to vector<2x32xf32>
    %133 = vector.extract_strided_slice %118 {offsets = [0, 64], sizes = [2, 32], strides = [1, 1]} : vector<2x96xf32> to vector<2x32xf32>
    %134 = arith.addf %133, %3 : vector<2x32xf32>
    %135 = arith.mulf %130, %134 : vector<2x32xf32>
    %136 = arith.addf %132, %135 : vector<2x32xf32>
    %137 = math.tanh %136 : vector<2x32xf32>
    %138 = arith.subf %112, %137 : vector<2x32xf32>
    %139 = arith.mulf %131, %138 : vector<2x32xf32>
    %140 = arith.addf %137, %139 : vector<2x32xf32>
    %141 = arith.index_cast %c4_i32 : i32 to index
    %c0_31 = arith.constant 0 : index
    %c0_32 = arith.constant 0 : index
    %142 = vector.load %arg3[%141, %c0_31, %c0_32] : memref<8x2x32xf32, #tpu.memory_space<vmem>>, vector<1x2x32xf32>
    %143 = vector.shape_cast %142 : vector<1x2x32xf32> to vector<2x32xf32>
    %144 = vector.shape_cast %140 : vector<2x32xf32> to vector<1x2x32xf32>
    tpu.vector_store %arg3[%141, %c0_31, %c0_32], %144 {strides = array<i32>} : memref<8x2x32xf32, #tpu.memory_space<vmem>>, vector<1x2x32xf32>,
    %c5_i32 = arith.constant 5 : i32
    %145 = arith.truncf %140 : vector<2x32xf32> to vector<2x32xbf16>
    %cst_33 = arith.constant dense<0.000000e+00> : vector<2x96xf32>
    %146 = tpu.matmul %145, %0, %cst_33 {dimension_numbers = #tpu.dot_dimension_numbers<[1], [0], [0], [1], [0, 0, 1, 1], [], []>} : vector<2x32xbf16>, vector<32x96xbf16>, vector<2x96xf32> -> vector<2x96xf32>
    %147 = arith.index_cast %c5_i32 : i32 to index
    %c0_34 = arith.constant 0 : index
    %c0_35 = arith.constant 0 : index
    %148 = vector.load %arg0[%147, %c0_34, %c0_35] : memref<8x2x96xf32, #tpu.memory_space<vmem>>, vector<1x2x96xf32>
    %149 = vector.shape_cast %148 : vector<1x2x96xf32> to vector<2x96xf32>
    %150 = vector.extract_strided_slice %149 {offsets = [0, 0], sizes = [2, 64], strides = [1, 1]} : vector<2x96xf32> to vector<2x64xf32>
    %151 = vector.extract_strided_slice %146 {offsets = [0, 0], sizes = [2, 64], strides = [1, 1]} : vector<2x96xf32> to vector<2x64xf32>
    %152 = arith.addf %150, %151 : vector<2x64xf32>
    %153 = arith.negf %152 : vector<2x64xf32>
    %154 = math.exp %153 : vector<2x64xf32>
    %cst_36 = arith.constant 1.000000e+00 : f32
    %155 = vector.broadcast %cst_36 : f32 to vector<2x64xf32>
    %156 = arith.addf %155, %154 : vector<2x64xf32>
    %157 = arith.divf %155, %156 : vector<2x64xf32>
    %158 = vector.extract_strided_slice %157 {offsets = [0, 0], sizes = [2, 32], strides = [1, 1]} : vector<2x64xf32> to vector<2x32xf32>
    %159 = vector.extract_strided_slice %157 {offsets = [0, 32], sizes = [2, 32], strides = [1, 1]} : vector<2x64xf32> to vector<2x32xf32>
    %160 = vector.extract_strided_slice %149 {offsets = [0, 64], sizes = [2, 32], strides = [1, 1]} : vector<2x96xf32> to vector<2x32xf32>
    %161 = vector.extract_strided_slice %146 {offsets = [0, 64], sizes = [2, 32], strides = [1, 1]} : vector<2x96xf32> to vector<2x32xf32>
    %162 = arith.addf %161, %3 : vector<2x32xf32>
    %163 = arith.mulf %158, %162 : vector<2x32xf32>
    %164 = arith.addf %160, %163 : vector<2x32xf32>
    %165 = math.tanh %164 : vector<2x32xf32>
    %166 = arith.subf %140, %165 : vector<2x32xf32>
    %167 = arith.mulf %159, %166 : vector<2x32xf32>
    %168 = arith.addf %165, %167 : vector<2x32xf32>
    %169 = arith.index_cast %c5_i32 : i32 to index
    %c0_37 = arith.constant 0 : index
    %c0_38 = arith.constant 0 : index
    %170 = vector.load %arg3[%169, %c0_37, %c0_38] : memref<8x2x32xf32, #tpu.memory_space<vmem>>, vector<1x2x32xf32>
    %171 = vector.shape_cast %170 : vector<1x2x32xf32> to vector<2x32xf32>
    %172 = vector.shape_cast %168 : vector<2x32xf32> to vector<1x2x32xf32>
    tpu.vector_store %arg3[%169, %c0_37, %c0_38], %172 {strides = array<i32>} : memref<8x2x32xf32, #tpu.memory_space<vmem>>, vector<1x2x32xf32>,
    %c6_i32 = arith.constant 6 : i32
    %173 = arith.truncf %168 : vector<2x32xf32> to vector<2x32xbf16>
    %cst_39 = arith.constant dense<0.000000e+00> : vector<2x96xf32>
    %174 = tpu.matmul %173, %0, %cst_39 {dimension_numbers = #tpu.dot_dimension_numbers<[1], [0], [0], [1], [0, 0, 1, 1], [], []>} : vector<2x32xbf16>, vector<32x96xbf16>, vector<2x96xf32> -> vector<2x96xf32>
    %175 = arith.index_cast %c6_i32 : i32 to index
    %c0_40 = arith.constant 0 : index
    %c0_41 = arith.constant 0 : index
    %176 = vector.load %arg0[%175, %c0_40, %c0_41] : memref<8x2x96xf32, #tpu.memory_space<vmem>>, vector<1x2x96xf32>
    %177 = vector.shape_cast %176 : vector<1x2x96xf32> to vector<2x96xf32>
    %178 = vector.extract_strided_slice %177 {offsets = [0, 0], sizes = [2, 64], strides = [1, 1]} : vector<2x96xf32> to vector<2x64xf32>
    %179 = vector.extract_strided_slice %174 {offsets = [0, 0], sizes = [2, 64], strides = [1, 1]} : vector<2x96xf32> to vector<2x64xf32>
    %180 = arith.addf %178, %179 : vector<2x64xf32>
    %181 = arith.negf %180 : vector<2x64xf32>
    %182 = math.exp %181 : vector<2x64xf32>
    %cst_42 = arith.constant 1.000000e+00 : f32
    %183 = vector.broadcast %cst_42 : f32 to vector<2x64xf32>
    %184 = arith.addf %183, %182 : vector<2x64xf32>
    %185 = arith.divf %183, %184 : vector<2x64xf32>
    %186 = vector.extract_strided_slice %185 {offsets = [0, 0], sizes = [2, 32], strides = [1, 1]} : vector<2x64xf32> to vector<2x32xf32>
    %187 = vector.extract_strided_slice %185 {offsets = [0, 32], sizes = [2, 32], strides = [1, 1]} : vector<2x64xf32> to vector<2x32xf32>
    %188 = vector.extract_strided_slice %177 {offsets = [0, 64], sizes = [2, 32], strides = [1, 1]} : vector<2x96xf32> to vector<2x32xf32>
    %189 = vector.extract_strided_slice %174 {offsets = [0, 64], sizes = [2, 32], strides = [1, 1]} : vector<2x96xf32> to vector<2x32xf32>
    %190 = arith.addf %189, %3 : vector<2x32xf32>
    %191 = arith.mulf %186, %190 : vector<2x32xf32>
    %192 = arith.addf %188, %191 : vector<2x32xf32>
    %193 = math.tanh %192 : vector<2x32xf32>
    %194 = arith.subf %168, %193 : vector<2x32xf32>
    %195 = arith.mulf %187, %194 : vector<2x32xf32>
    %196 = arith.addf %193, %195 : vector<2x32xf32>
    %197 = arith.index_cast %c6_i32 : i32 to index
    %c0_43 = arith.constant 0 : index
    %c0_44 = arith.constant 0 : index
    %198 = vector.load %arg3[%197, %c0_43, %c0_44] : memref<8x2x32xf32, #tpu.memory_space<vmem>>, vector<1x2x32xf32>
    %199 = vector.shape_cast %198 : vector<1x2x32xf32> to vector<2x32xf32>
    %200 = vector.shape_cast %196 : vector<2x32xf32> to vector<1x2x32xf32>
    tpu.vector_store %arg3[%197, %c0_43, %c0_44], %200 {strides = array<i32>} : memref<8x2x32xf32, #tpu.memory_space<vmem>>, vector<1x2x32xf32>,
    %c7_i32 = arith.constant 7 : i32
    %201 = arith.truncf %196 : vector<2x32xf32> to vector<2x32xbf16>
    %cst_45 = arith.constant dense<0.000000e+00> : vector<2x96xf32>
    %202 = tpu.matmul %201, %0, %cst_45 {dimension_numbers = #tpu.dot_dimension_numbers<[1], [0], [0], [1], [0, 0, 1, 1], [], []>} : vector<2x32xbf16>, vector<32x96xbf16>, vector<2x96xf32> -> vector<2x96xf32>
    %203 = arith.index_cast %c7_i32 : i32 to index
    %c0_46 = arith.constant 0 : index
    %c0_47 = arith.constant 0 : index
    %204 = vector.load %arg0[%203, %c0_46, %c0_47] : memref<8x2x96xf32, #tpu.memory_space<vmem>>, vector<1x2x96xf32>
    %205 = vector.shape_cast %204 : vector<1x2x96xf32> to vector<2x96xf32>
    %206 = vector.extract_strided_slice %205 {offsets = [0, 0], sizes = [2, 64], strides = [1, 1]} : vector<2x96xf32> to vector<2x64xf32>
    %207 = vector.extract_strided_slice %202 {offsets = [0, 0], sizes = [2, 64], strides = [1, 1]} : vector<2x96xf32> to vector<2x64xf32>
    %208 = arith.addf %206, %207 : vector<2x64xf32>
    %209 = arith.negf %208 : vector<2x64xf32>
    %210 = math.exp %209 : vector<2x64xf32>
    %cst_48 = arith.constant 1.000000e+00 : f32
    %211 = vector.broadcast %cst_48 : f32 to vector<2x64xf32>
    %212 = arith.addf %211, %210 : vector<2x64xf32>
    %213 = arith.divf %211, %212 : vector<2x64xf32>
    %214 = vector.extract_strided_slice %213 {offsets = [0, 0], sizes = [2, 32], strides = [1, 1]} : vector<2x64xf32> to vector<2x32xf32>
    %215 = vector.extract_strided_slice %213 {offsets = [0, 32], sizes = [2, 32], strides = [1, 1]} : vector<2x64xf32> to vector<2x32xf32>
    %216 = vector.extract_strided_slice %205 {offsets = [0, 64], sizes = [2, 32], strides = [1, 1]} : vector<2x96xf32> to vector<2x32xf32>
    %217 = vector.extract_strided_slice %202 {offsets = [0, 64], sizes = [2, 32], strides = [1, 1]} : vector<2x96xf32> to vector<2x32xf32>
    %218 = arith.addf %217, %3 : vector<2x32xf32>
    %219 = arith.mulf %214, %218 : vector<2x32xf32>
    %220 = arith.addf %216, %219 : vector<2x32xf32>
    %221 = math.tanh %220 : vector<2x32xf32>
    %222 = arith.subf %196, %221 : vector<2x32xf32>
    %223 = arith.mulf %215, %222 : vector<2x32xf32>
    %224 = arith.addf %221, %223 : vector<2x32xf32>
    %225 = arith.index_cast %c7_i32 : i32 to index
    %c0_49 = arith.constant 0 : index
    %c0_50 = arith.constant 0 : index
    %226 = vector.load %arg3[%225, %c0_49, %c0_50] : memref<8x2x32xf32, #tpu.memory_space<vmem>>, vector<1x2x32xf32>
    %227 = vector.shape_cast %226 : vector<1x2x32xf32> to vector<2x32xf32>
    %228 = vector.shape_cast %224 : vector<2x32xf32> to vector<1x2x32xf32>
    tpu.vector_store %arg3[%225, %c0_49, %c0_50], %228 {strides = array<i32>} : memref<8x2x32xf32, #tpu.memory_space<vmem>>, vector<1x2x32xf32>,
    %c8_i32 = arith.constant 8 : i32
    return
  }
}

</mosaic_0001>

<llo_original>
// kernel: gru_forward.1
$region0: #{gru_forward.1}
  #allocation0 [shape = 'u32[]', space=smem, size = 0x4, offset = 0x4, fixed_abs, tag = 'smem constant byte address 0x4 - core index']
  #allocation1 [shape = 'u32[144,128]{1,0:T(1,128)}', space=vmem, size = 0x12000, scoped, tag = 'internal scratch']
  %s0 = inlined_call_operand.vmem [shape: f32[8,2,96], index: 0, kind: input, shape index: {}]
  %s1 = inlined_call_operand.vmem [shape: bf16[32,96], index: 1, kind: input, shape index: {}]
  %s2 = inlined_call_operand.vmem [shape: f32[1,32], index: 2, kind: input, shape index: {}]
  %s3 = inlined_call_operand.hbm [shape: f32[8,2,32], index: 3, kind: output, shape index: {}]
  %s4 = sld [smem:[#allocation0]]
  $region22: #{gru_forward.1} parent=0
    _
  %s6 = ssub.s32 1, %s4
  %s7 = scalar_select 0, %s6, %s4
  $region1: #{gru_forward.1} parent=0
    #allocation2 [shape = 'u8[8192]{0}', space=vmem, size = 0x2000, scoped, tag = 'output window, operand 0, single buffered']
    #allocation3 [shape = 's32[1]{0}', space=sflag, size = 0x4, scoped, tag = 'scoped memory for gru_forward.1']
    %8 = vsyncpa [#allocation3], 0
    // Predicated region
    $region2: #{gru_forward.1} parent=1 // pred_check
      _
    $region3: #{gru_forward.1} parent=1 // pred_check_branch
      %10 = sbr.rel (0) target = $region5
    $region4: #{gru_forward.1} parent=1 // pred_region
      _
    $region5: #{gru_forward.1} parent=1 // pred_fallthru
      _
    // Predicated region
    $region6: #{gru_forward.1} parent=1 // pred_check
      _
    $region7: #{gru_forward.1} parent=1 // pred_check_branch
      %12 = sbr.rel (0) target = $region9
    $region8: #{gru_forward.1} parent=1 // pred_region
      _
    $region9: #{gru_forward.1} parent=1 // pred_fallthru
      _
    // Predicated region
    $region10: #{gru_forward.1} parent=1 // pred_check
      _
    $region11: #{gru_forward.1} parent=1 // pred_check_branch
      %14 = sbr.rel (0) target = $region13
    $region12: #{gru_forward.1} parent=1 // pred_region
      _
    $region13: #{gru_forward.1} parent=1 // pred_fallthru
      _
    %v16 = vld [vmem:[%s1] sm:$0xf]
    %v17 = vld [vmem:[%s1 + $0x4] sm:$0xf]
    %v18 = vld [vmem:[%s1 + $0x8] sm:$0xf]
    %v19 = vld [vmem:[%s1 + $0xc] sm:$0xf]
    %v20 = vld [vmem:[%s2] sm:$0x1]
    %v22 = vlaneseq
    %v23 = vshrl.u32 %v22, 7
    %v24 = vsub.s32 0, %v23
    %v25 = vrot.slane %v20, %v24
    %v30 = vunpack.c.l.b16 %v16
    %v31 = vunpack.c.l.b16 %v17
    %v32 = vunpack.c.l.b16 %v18
    %v33 = vunpack.c.l.b16 %v19
    %v34 = vpack.c.b16 %v31, %v30
    %v35 = vpack.c.b16 %v33, %v32
    %vm38 = vcmask 261120
    %v40 = vsel %vm38, 0, 0
    %42 = vmatprep.subr.bf16.mxu0 0
    %43 = vmatpush1.bf16.msra.mxu0 0
    %44 = vmatprep.subr.bf16.mxu0 0
    %45 = vmatpush1.bf16.msra.mxu0 0
    %46 = vmatprep.subr.bf16.mxu0 0
    %47 = vmatpush1.bf16.msra.mxu0 0
    %48 = vmatprep.subr.bf16.mxu0 0
    %49 = vmatpush1.bf16.msra.mxu0 0
    %50 = vmatprep.subr.bf16.mxu0 0
    %51 = vmatpush1.bf16.msra.mxu0 0
    %52 = vmatprep.subr.bf16.mxu0 0
    %53 = vmatpush1.bf16.msra.mxu0 0
    %54 = vmatprep.subr.bf16.mxu0 0
    %55 = vmatpush1.bf16.msra.mxu0 %v35
    %56 = vmatprep.subr.bf16.mxu0 0
    %57 = vmatpush1.bf16.msra.mxu0 %v34
    %58 = vmatprep.subr.bf16.mxu0 0
    %59 = vmatpush2.bf16.msra.mxu0 0
    %60 = vmatprep.subr.bf16.mxu0 0
    %61 = vmatpush2.bf16.msra.mxu0 0
    %62 = vmatprep.subr.bf16.mxu0 0
    %63 = vmatpush2.bf16.msra.mxu0 0
    %64 = vmatprep.subr.bf16.mxu0 0
    %65 = vmatpush2.bf16.msra.mxu0 0
    %66 = vmatprep.subr.bf16.mxu0 0
    %67 = vmatpush2.bf16.msra.mxu0 0
    %68 = vmatprep.subr.bf16.mxu0 0
    %69 = vmatpush2.bf16.msra.mxu0 0
    %70 = vmatprep.subr.bf16.mxu0 0
    %71 = vmatpush2.bf16.msra.mxu0 0
    %72 = vmatprep.subr.bf16.mxu0 0
    %73 = vmatpush2.bf16.msra.mxu0 0
    %74 = vmatprep.mubr.bf16.mxu0 0
    %75 = vmatmul.mubr.bf16.gmra.mxu0 %v40
    %v76 = vpop.f32.mrf.mxu0
    %v77 = vadd.f32 0.0, %v76
    %v78 = vpop.f32.mrf.mxu0
    %v79 = vpop.f32.mrf.mxu0
    %v80 = vpop.f32.mrf.mxu0
    %81 = vdwg.mxu0
    %v82 = vld [vmem:[%s0] sm:$0x3]
    %v83 = vadd.f32 %v82, %v77
    %v84 = vxor.u32 %v83, 2147483648
    %v85 = vmul.f32 %v84, 1.442695
    %v86 = vpow.pop %v85
    %v87 = vadd.f32 %v86, 1.0
    %v88 = vrcp.pop %v87
    %v89 = vmul.f32 1.0, %v88
    %90 = vrot.lane.b32.xlu0 %v25, 64
    %v91 = vpop.permute.xlu0 %90
    %v93 = vadd.f32 %v77, %v91
    %95 = vrot.lane.b32.xlu0 %v93, 64
    %v96 = vpop.permute.xlu0 %95
    %v98 = vmul.f32 %v89, %v96
    %100 = vrot.lane.b32.xlu0 %v98, 64
    %v101 = vpop.permute.xlu0 %100
    %v103 = vadd.f32 %v82, %v101
    %v104 = vtanh.pop %v103
    %v105 = vsub.f32 0.0, %v104
    %107 = vrot.lane.b32.xlu0 %v105, 96
    %v108 = vpop.permute.xlu0 %107
    %v110 = vmul.f32 %v89, %v108
    %112 = vrot.lane.b32.xlu0 %v110, 32
    %v113 = vpop.permute.xlu0 %112
    %v115 = vadd.f32 %v104, %v113
    %117 = vrot.lane.b32.xlu0 %v115, 64
    %v118 = vpop.permute.xlu0 %117
    %vm120 = vcmask 254976
    %121 = vst.msk [vmem:[#allocation2] sm:$0x3] %vm120, %v118
    %v122 = vpack.c.bf16 %v115, %v115
    %124 = vrot.lane.b32.xlu0 %v122, 64
    %v125 = vpop.permute.xlu0 %124
    %v127 = vsel %vm38, %v125, 0
    %129 = vmatprep.subr.bf16.mxu0 0
    %130 = vmatpush1.bf16.msra.mxu0 0
    %131 = vmatprep.subr.bf16.mxu0 0
    %132 = vmatpush1.bf16.msra.mxu0 0
    %133 = vmatprep.subr.bf16.mxu0 0
    %134 = vmatpush1.bf16.msra.mxu0 0
    %135 = vmatprep.subr.bf16.mxu0 0
    %136 = vmatpush1.bf16.msra.mxu0 0
    %137 = vmatprep.subr.bf16.mxu0 0
    %138 = vmatpush1.bf16.msra.mxu0 0
    %139 = vmatprep.subr.bf16.mxu0 0
    %140 = vmatpush1.bf16.msra.mxu0 0
    %141 = vmatprep.subr.bf16.mxu0 0
    %142 = vmatpush1.bf16.msra.mxu0 %v35
    %143 = vmatprep.subr.bf16.mxu0 0
    %144 = vmatpush1.bf16.msra.mxu0 %v34
    %145 = vmatprep.subr.bf16.mxu0 0
    %146 = vmatpush2.bf16.msra.mxu0 0
    %147 = vmatprep.subr.bf16.mxu0 0
    %148 = vmatpush2.bf16.msra.mxu0 0
    %149 = vmatprep.subr.bf16.mxu0 0
    %150 = vmatpush2.bf16.msra.mxu0 0
    %151 = vmatprep.subr.bf16.mxu0 0
    %152 = vmatpush2.bf16.msra.mxu0 0
    %153 = vmatprep.subr.bf16.mxu0 0
    %154 = vmatpush2.bf16.msra.mxu0 0
    %155 = vmatprep.subr.bf16.mxu0 0
    %156 = vmatpush2.bf16.msra.mxu0 0
    %157 = vmatprep.subr.bf16.mxu0 0
    %158 = vmatpush2.bf16.msra.mxu0 0
    %159 = vmatprep.subr.bf16.mxu0 0
    %160 = vmatpush2.bf16.msra.mxu0 0
    %161 = vmatprep.mubr.bf16.mxu0 0
    %162 = vmatmul.mubr.bf16.gmra.mxu0 %v127
    %v163 = vpop.f32.mrf.mxu0
    %v164 = vadd.f32 0.0, %v163
    %v165 = vpop.f32.mrf.mxu0
    %v166 = vpop.f32.mrf.mxu0
    %v167 = vpop.f32.mrf.mxu0
    %168 = vdwg.mxu0
    %s169 = scalar_lea.vmem %s0, 2
    %v170 = vld [vmem:[%s169] sm:$0x3]
    %v171 = vadd.f32 %v170, %v164
    %v172 = vxor.u32 %v171, 2147483648
    %v173 = vmul.f32 %v172, 1.442695
    %v174 = vpow.pop %v173
    %v175 = vadd.f32 %v174, 1.0
    %v176 = vrcp.pop %v175
    %v177 = vmul.f32 1.0, %v176
    %v178 = vadd.f32 %v164, %v91
    %180 = vrot.lane.b32.xlu0 %v178, 64
    %v181 = vpop.permute.xlu0 %180
    %v183 = vmul.f32 %v177, %v181
    %185 = vrot.lane.b32.xlu0 %v183, 64
    %v186 = vpop.permute.xlu0 %185
    %v188 = vadd.f32 %v170, %v186
    %v189 = vtanh.pop %v188
    %v190 = vsub.f32 %v115, %v189
    %192 = vrot.lane.b32.xlu0 %v190, 96
    %v193 = vpop.permute.xlu0 %192
    %v195 = vmul.f32 %v177, %v193
    %197 = vrot.lane.b32.xlu0 %v195, 32
    %v198 = vpop.permute.xlu0 %197
    %v200 = vadd.f32 %v189, %v198
    %202 = vrot.lane.b32.xlu0 %v200, 64
    %v203 = vpop.permute.xlu0 %202
    %s205 = scalar_lea.vmem [#allocation2], 2
    %206 = vst.msk [vmem:[%s205] sm:$0x3] %vm120, %v203
    %v207 = vpack.c.bf16 %v200, %v200
    %209 = vrot.lane.b32.xlu0 %v207, 64
    %v210 = vpop.permute.xlu0 %209
    %v212 = vsel %vm38, %v210, 0
    %214 = vmatprep.subr.bf16.mxu0 0
    %215 = vmatpush1.bf16.msra.mxu0 0
    %216 = vmatprep.subr.bf16.mxu0 0
    %217 = vmatpush1.bf16.msra.mxu0 0
    %218 = vmatprep.subr.bf16.mxu0 0
    %219 = vmatpush1.bf16.msra.mxu0 0
    %220 = vmatprep.subr.bf16.mxu0 0
    %221 = vmatpush1.bf16.msra.mxu0 0
    %222 = vmatprep.subr.bf16.mxu0 0
    %223 = vmatpush1.bf16.msra.mxu0 0
    %224 = vmatprep.subr.bf16.mxu0 0
    %225 = vmatpush1.bf16.msra.mxu0 0
    %226 = vmatprep.subr.bf16.mxu0 0
    %227 = vmatpush1.bf16.msra.mxu0 %v35
    %228 = vmatprep.subr.bf16.mxu0 0
    %229 = vmatpush1.bf16.msra.mxu0 %v34
    %230 = vmatprep.subr.bf16.mxu0 0
    %231 = vmatpush2.bf16.msra.mxu0 0
    %232 = vmatprep.subr.bf16.mxu0 0
    %233 = vmatpush2.bf16.msra.mxu0 0
    %234 = vmatprep.subr.bf16.mxu0 0
    %235 = vmatpush2.bf16.msra.mxu0 0
    %236 = vmatprep.subr.bf16.mxu0 0
    %237 = vmatpush2.bf16.msra.mxu0 0
    %238 = vmatprep.subr.bf16.mxu0 0
    %239 = vmatpush2.bf16.msra.mxu0 0
    %240 = vmatprep.subr.bf16.mxu0 0
    %241 = vmatpush2.bf16.msra.mxu0 0
    %242 = vmatprep.subr.bf16.mxu0 0
    %243 = vmatpush2.bf16.msra.mxu0 0
    %244 = vmatprep.subr.bf16.mxu0 0
    %245 = vmatpush2.bf16.msra.mxu0 0
    %246 = vmatprep.mubr.bf16.mxu0 0
    %247 = vmatmul.mubr.bf16.gmra.mxu0 %v212
    %v248 = vpop.f32.mrf.mxu0
    %v249 = vadd.f32 0.0, %v248
    %v250 = vpop.f32.mrf.mxu0
    %v251 = vpop.f32.mrf.mxu0
    %v252 = vpop.f32.mrf.mxu0
    %253 = vdwg.mxu0
    %s254 = scalar_lea.vmem %s0, 4
    %v255 = vld [vmem:[%s254] sm:$0x3]
    %v256 = vadd.f32 %v255, %v249
    %v257 = vxor.u32 %v256, 2147483648
    %v258 = vmul.f32 %v257, 1.442695
    %v259 = vpow.pop %v258
    %v260 = vadd.f32 %v259, 1.0
    %v261 = vrcp.pop %v260
    %v262 = vmul.f32 1.0, %v261
    %v263 = vadd.f32 %v249, %v91
    %265 = vrot.lane.b32.xlu0 %v263, 64
    %v266 = vpop.permute.xlu0 %265
    %v268 = vmul.f32 %v262, %v266
    %270 = vrot.lane.b32.xlu0 %v268, 64
    %v271 = vpop.permute.xlu0 %270
    %v273 = vadd.f32 %v255, %v271
    %v274 = vtanh.pop %v273
    %v275 = vsub.f32 %v200, %v274
    %277 = vrot.lane.b32.xlu0 %v275, 96
    %v278 = vpop.permute.xlu0 %277
    %v280 = vmul.f32 %v262, %v278
    %282 = vrot.lane.b32.xlu0 %v280, 32
    %v283 = vpop.permute.xlu0 %282
    %v285 = vadd.f32 %v274, %v283
    %287 = vrot.lane.b32.xlu0 %v285, 64
    %v288 = vpop.permute.xlu0 %287
    %s290 = scalar_lea.vmem [#allocation2], 4
    %291 = vst.msk [vmem:[%s290] sm:$0x3] %vm120, %v288
    %v292 = vpack.c.bf16 %v285, %v285
    %294 = vrot.lane.b32.xlu0 %v292, 64
    %v295 = vpop.permute.xlu0 %294
    %v297 = vsel %vm38, %v295, 0
    %299 = vmatprep.subr.bf16.mxu0 0
    %300 = vmatpush1.bf16.msra.mxu0 0
    %301 = vmatprep.subr.bf16.mxu0 0
    %302 = vmatpush1.bf16.msra.mxu0 0
    %303 = vmatprep.subr.bf16.mxu0 0
    %304 = vmatpush1.bf16.msra.mxu0 0
    %305 = vmatprep.subr.bf16.mxu0 0
    %306 = vmatpush1.bf16.msra.mxu0 0
    %307 = vmatprep.subr.bf16.mxu0 0
    %308 = vmatpush1.bf16.msra.mxu0 0
    %309 = vmatprep.subr.bf16.mxu0 0
    %310 = vmatpush1.bf16.msra.mxu0 0
    %311 = vmatprep.subr.bf16.mxu0 0
    %312 = vmatpush1.bf16.msra.mxu0 %v35
    %313 = vmatprep.subr.bf16.mxu0 0
    %314 = vmatpush1.bf16.msra.mxu0 %v34
    %315 = vmatprep.subr.bf16.mxu0 0
    %316 = vmatpush2.bf16.msra.mxu0 0
    %317 = vmatprep.subr.bf16.mxu0 0
    %318 = vmatpush2.bf16.msra.mxu0 0
    %319 = vmatprep.subr.bf16.mxu0 0
    %320 = vmatpush2.bf16.msra.mxu0 0
    %321 = vmatprep.subr.bf16.mxu0 0
    %322 = vmatpush2.bf16.msra.mxu0 0
    %323 = vmatprep.subr.bf16.mxu0 0
    %324 = vmatpush2.bf16.msra.mxu0 0
    %325 = vmatprep.subr.bf16.mxu0 0
    %326 = vmatpush2.bf16.msra.mxu0 0
    %327 = vmatprep.subr.bf16.mxu0 0
    %328 = vmatpush2.bf16.msra.mxu0 0
    %329 = vmatprep.subr.bf16.mxu0 0
    %330 = vmatpush2.bf16.msra.mxu0 0
    %331 = vmatprep.mubr.bf16.mxu0 0
    %332 = vmatmul.mubr.bf16.gmra.mxu0 %v297
    %v333 = vpop.f32.mrf.mxu0
    %v334 = vadd.f32 0.0, %v333
    %v335 = vpop.f32.mrf.mxu0
    %v336 = vpop.f32.mrf.mxu0
    %v337 = vpop.f32.mrf.mxu0
    %338 = vdwg.mxu0
    %s339 = scalar_lea.vmem %s0, 6
    %v340 = vld [vmem:[%s339] sm:$0x3]
    %v341 = vadd.f32 %v340, %v334
    %v342 = vxor.u32 %v341, 2147483648
    %v343 = vmul.f32 %v342, 1.442695
    %v344 = vpow.pop %v343
    %v345 = vadd.f32 %v344, 1.0
    %v346 = vrcp.pop %v345
    %v347 = vmul.f32 1.0, %v346
    %v348 = vadd.f32 %v334, %v91
    %350 = vrot.lane.b32.xlu0 %v348, 64
    %v351 = vpop.permute.xlu0 %350
    %v353 = vmul.f32 %v347, %v351
    %355 = vrot.lane.b32.xlu0 %v353, 64
    %v356 = vpop.permute.xlu0 %355
    %v358 = vadd.f32 %v340, %v356
    %v359 = vtanh.pop %v358
    %v360 = vsub.f32 %v285, %v359
    %362 = vrot.lane.b32.xlu0 %v360, 96
    %v363 = vpop.permute.xlu0 %362
    %v365 = vmul.f32 %v347, %v363
    %367 = vrot.lane.b32.xlu0 %v365, 32
    %v368 = vpop.permute.xlu0 %367
    %v370 = vadd.f32 %v359, %v368
    %372 = vrot.lane.b32.xlu0 %v370, 64
    %v373 = vpop.permute.xlu0 %372
    %s375 = scalar_lea.vmem [#allocation2], 6
    %376 = vst.msk [vmem:[%s375] sm:$0x3] %vm120, %v373
    %v377 = vpack.c.bf16 %v370, %v370
    %379 = vrot.lane.b32.xlu0 %v377, 64
    %v380 = vpop.permute.xlu0 %379
    %v382 = vsel %vm38, %v380, 0
    %384 = vmatprep.subr.bf16.mxu0 0
    %385 = vmatpush1.bf16.msra.mxu0 0
    %386 = vmatprep.subr.bf16.mxu0 0
    %387 = vmatpush1.bf16.msra.mxu0 0
    %388 = vmatprep.subr.bf16.mxu0 0
    %389 = vmatpush1.bf16.msra.mxu0 0
    %390 = vmatprep.subr.bf16.mxu0 0
    %391 = vmatpush1.bf16.msra.mxu0 0
    %392 = vmatprep.subr.bf16.mxu0 0
    %393 = vmatpush1.bf16.msra.mxu0 0
    %394 = vmatprep.subr.bf16.mxu0 0
    %395 = vmatpush1.bf16.msra.mxu0 0
    %396 = vmatprep.subr.bf16.mxu0 0
    %397 = vmatpush1.bf16.msra.mxu0 %v35
    %398 = vmatprep.subr.bf16.mxu0 0
    %399 = vmatpush1.bf16.msra.mxu0 %v34
    %400 = vmatprep.subr.bf16.mxu0 0
    %401 = vmatpush2.bf16.msra.mxu0 0
    %402 = vmatprep.subr.bf16.mxu0 0
    %403 = vmatpush2.bf16.msra.mxu0 0
    %404 = vmatprep.subr.bf16.mxu0 0
    %405 = vmatpush2.bf16.msra.mxu0 0
    %406 = vmatprep.subr.bf16.mxu0 0
    %407 = vmatpush2.bf16.msra.mxu0 0
    %408 = vmatprep.subr.bf16.mxu0 0
    %409 = vmatpush2.bf16.msra.mxu0 0
    %410 = vmatprep.subr.bf16.mxu0 0
    %411 = vmatpush2.bf16.msra.mxu0 0
    %412 = vmatprep.subr.bf16.mxu0 0
    %413 = vmatpush2.bf16.msra.mxu0 0
    %414 = vmatprep.subr.bf16.mxu0 0
    %415 = vmatpush2.bf16.msra.mxu0 0
    %416 = vmatprep.mubr.bf16.mxu0 0
    %417 = vmatmul.mubr.bf16.gmra.mxu0 %v382
    %v418 = vpop.f32.mrf.mxu0
    %v419 = vadd.f32 0.0, %v418
    %v420 = vpop.f32.mrf.mxu0
    %v421 = vpop.f32.mrf.mxu0
    %v422 = vpop.f32.mrf.mxu0
    %423 = vdwg.mxu0
    %s424 = scalar_lea.vmem %s0, 8
    %v425 = vld [vmem:[%s424] sm:$0x3]
    %v426 = vadd.f32 %v425, %v419
    %v427 = vxor.u32 %v426, 2147483648
    %v428 = vmul.f32 %v427, 1.442695
    %v429 = vpow.pop %v428
    %v430 = vadd.f32 %v429, 1.0
    %v431 = vrcp.pop %v430
    %v432 = vmul.f32 1.0, %v431
    %v433 = vadd.f32 %v419, %v91
    %435 = vrot.lane.b32.xlu0 %v433, 64
    %v436 = vpop.permute.xlu0 %435
    %v438 = vmul.f32 %v432, %v436
    %440 = vrot.lane.b32.xlu0 %v438, 64
    %v441 = vpop.permute.xlu0 %440
    %v443 = vadd.f32 %v425, %v441
    %v444 = vtanh.pop %v443
    %v445 = vsub.f32 %v370, %v444
    %447 = vrot.lane.b32.xlu0 %v445, 96
    %v448 = vpop.permute.xlu0 %447
    %v450 = vmul.f32 %v432, %v448
    %452 = vrot.lane.b32.xlu0 %v450, 32
    %v453 = vpop.permute.xlu0 %452
    %v455 = vadd.f32 %v444, %v453
    %457 = vrot.lane.b32.xlu0 %v455, 64
    %v458 = vpop.permute.xlu0 %457
    %s460 = scalar_lea.vmem [#allocation2], 8
    %461 = vst.msk [vmem:[%s460] sm:$0x3] %vm120, %v458
    %v462 = vpack.c.bf16 %v455, %v455
    %464 = vrot.lane.b32.xlu0 %v462, 64
    %v465 = vpop.permute.xlu0 %464
    %v467 = vsel %vm38, %v465, 0
    %469 = vmatprep.subr.bf16.mxu0 0
    %470 = vmatpush1.bf16.msra.mxu0 0
    %471 = vmatprep.subr.bf16.mxu0 0
    %472 = vmatpush1.bf16.msra.mxu0 0
    %473 = vmatprep.subr.bf16.mxu0 0
    %474 = vmatpush1.bf16.msra.mxu0 0
    %475 = vmatprep.subr.bf16.mxu0 0
    %476 = vmatpush1.bf16.msra.mxu0 0
    %477 = vmatprep.subr.bf16.mxu0 0
    %478 = vmatpush1.bf16.msra.mxu0 0
    %479 = vmatprep.subr.bf16.mxu0 0
    %480 = vmatpush1.bf16.msra.mxu0 0
    %481 = vmatprep.subr.bf16.mxu0 0
    %482 = vmatpush1.bf16.msra.mxu0 %v35
    %483 = vmatprep.subr.bf16.mxu0 0
    %484 = vmatpush1.bf16.msra.mxu0 %v34
    %485 = vmatprep.subr.bf16.mxu0 0
    %486 = vmatpush2.bf16.msra.mxu0 0
    %487 = vmatprep.subr.bf16.mxu0 0
    %488 = vmatpush2.bf16.msra.mxu0 0
    %489 = vmatprep.subr.bf16.mxu0 0
    %490 = vmatpush2.bf16.msra.mxu0 0
    %491 = vmatprep.subr.bf16.mxu0 0
    %492 = vmatpush2.bf16.msra.mxu0 0
    %493 = vmatprep.subr.bf16.mxu0 0
    %494 = vmatpush2.bf16.msra.mxu0 0
    %495 = vmatprep.subr.bf16.mxu0 0
    %496 = vmatpush2.bf16.msra.mxu0 0
    %497 = vmatprep.subr.bf16.mxu0 0
    %498 = vmatpush2.bf16.msra.mxu0 0
    %499 = vmatprep.subr.bf16.mxu0 0
    %500 = vmatpush2.bf16.msra.mxu0 0
    %501 = vmatprep.mubr.bf16.mxu0 0
    %502 = vmatmul.mubr.bf16.gmra.mxu0 %v467
    %v503 = vpop.f32.mrf.mxu0
    %v504 = vadd.f32 0.0, %v503
    %v505 = vpop.f32.mrf.mxu0
    %v506 = vpop.f32.mrf.mxu0
    %v507 = vpop.f32.mrf.mxu0
    %508 = vdwg.mxu0
    %s509 = scalar_lea.vmem %s0, 10
    %v510 = vld [vmem:[%s509] sm:$0x3]
    %v511 = vadd.f32 %v510, %v504
    %v512 = vxor.u32 %v511, 2147483648
    %v513 = vmul.f32 %v512, 1.442695
    %v514 = vpow.pop %v513
    %v515 = vadd.f32 %v514, 1.0
    %v516 = vrcp.pop %v515
    %v517 = vmul.f32 1.0, %v516
    %v518 = vadd.f32 %v504, %v91
    %520 = vrot.lane.b32.xlu0 %v518, 64
    %v521 = vpop.permute.xlu0 %520
    %v523 = vmul.f32 %v517, %v521
    %525 = vrot.lane.b32.xlu0 %v523, 64
    %v526 = vpop.permute.xlu0 %525
    %v528 = vadd.f32 %v510, %v526
    %v529 = vtanh.pop %v528
    %v530 = vsub.f32 %v455, %v529
    %532 = vrot.lane.b32.xlu0 %v530, 96
    %v533 = vpop.permute.xlu0 %532
    %v535 = vmul.f32 %v517, %v533
    %537 = vrot.lane.b32.xlu0 %v535, 32
    %v538 = vpop.permute.xlu0 %537
    %v540 = vadd.f32 %v529, %v538
    %542 = vrot.lane.b32.xlu0 %v540, 64
    %v543 = vpop.permute.xlu0 %542
    %s545 = scalar_lea.vmem [#allocation2], 10
    %546 = vst.msk [vmem:[%s545] sm:$0x3] %vm120, %v543
    %v547 = vpack.c.bf16 %v540, %v540
    %549 = vrot.lane.b32.xlu0 %v547, 64
    %v550 = vpop.permute.xlu0 %549
    %v552 = vsel %vm38, %v550, 0
    %554 = vmatprep.subr.bf16.mxu0 0
    %555 = vmatpush1.bf16.msra.mxu0 0
    %556 = vmatprep.subr.bf16.mxu0 0
    %557 = vmatpush1.bf16.msra.mxu0 0
    %558 = vmatprep.subr.bf16.mxu0 0
    %559 = vmatpush1.bf16.msra.mxu0 0
    %560 = vmatprep.subr.bf16.mxu0 0
    %561 = vmatpush1.bf16.msra.mxu0 0
    %562 = vmatprep.subr.bf16.mxu0 0
    %563 = vmatpush1.bf16.msra.mxu0 0
    %564 = vmatprep.subr.bf16.mxu0 0
    %565 = vmatpush1.bf16.msra.mxu0 0
    %566 = vmatprep.subr.bf16.mxu0 0
    %567 = vmatpush1.bf16.msra.mxu0 %v35
    %568 = vmatprep.subr.bf16.mxu0 0
    %569 = vmatpush1.bf16.msra.mxu0 %v34
    %570 = vmatprep.subr.bf16.mxu0 0
    %571 = vmatpush2.bf16.msra.mxu0 0
    %572 = vmatprep.subr.bf16.mxu0 0
    %573 = vmatpush2.bf16.msra.mxu0 0
    %574 = vmatprep.subr.bf16.mxu0 0
    %575 = vmatpush2.bf16.msra.mxu0 0
    %576 = vmatprep.subr.bf16.mxu0 0
    %577 = vmatpush2.bf16.msra.mxu0 0
    %578 = vmatprep.subr.bf16.mxu0 0
    %579 = vmatpush2.bf16.msra.mxu0 0
    %580 = vmatprep.subr.bf16.mxu0 0
    %581 = vmatpush2.bf16.msra.mxu0 0
    %582 = vmatprep.subr.bf16.mxu0 0
    %583 = vmatpush2.bf16.msra.mxu0 0
    %584 = vmatprep.subr.bf16.mxu0 0
    %585 = vmatpush2.bf16.msra.mxu0 0
    %586 = vmatprep.mubr.bf16.mxu0 0
    %587 = vmatmul.mubr.bf16.gmra.mxu0 %v552
    %v588 = vpop.f32.mrf.mxu0
    %v589 = vadd.f32 0.0, %v588
    %v590 = vpop.f32.mrf.mxu0
    %v591 = vpop.f32.mrf.mxu0
    %v592 = vpop.f32.mrf.mxu0
    %593 = vdwg.mxu0
    %s594 = scalar_lea.vmem %s0, 12
    %v595 = vld [vmem:[%s594] sm:$0x3]
    %v596 = vadd.f32 %v595, %v589
    %v597 = vxor.u32 %v596, 2147483648
    %v598 = vmul.f32 %v597, 1.442695
    %v599 = vpow.pop %v598
    %v600 = vadd.f32 %v599, 1.0
    %v601 = vrcp.pop %v600
    %v602 = vmul.f32 1.0, %v601
    %v603 = vadd.f32 %v589, %v91
    %605 = vrot.lane.b32.xlu0 %v603, 64
    %v606 = vpop.permute.xlu0 %605
    %v608 = vmul.f32 %v602, %v606
    %610 = vrot.lane.b32.xlu0 %v608, 64
    %v611 = vpop.permute.xlu0 %610
    %v613 = vadd.f32 %v595, %v611
    %v614 = vtanh.pop %v613
    %v615 = vsub.f32 %v540, %v614
    %617 = vrot.lane.b32.xlu0 %v615, 96
    %v618 = vpop.permute.xlu0 %617
    %v620 = vmul.f32 %v602, %v618
    %622 = vrot.lane.b32.xlu0 %v620, 32
    %v623 = vpop.permute.xlu0 %622
    %v625 = vadd.f32 %v614, %v623
    %627 = vrot.lane.b32.xlu0 %v625, 64
    %v628 = vpop.permute.xlu0 %627
    %s630 = scalar_lea.vmem [#allocation2], 12
    %631 = vst.msk [vmem:[%s630] sm:$0x3] %vm120, %v628
    %v632 = vpack.c.bf16 %v625, %v625
    %634 = vrot.lane.b32.xlu0 %v632, 64
    %v635 = vpop.permute.xlu0 %634
    %v637 = vsel %vm38, %v635, 0
    %639 = vmatprep.subr.bf16.mxu0 0
    %640 = vmatpush1.bf16.msra.mxu0 0
    %641 = vmatprep.subr.bf16.mxu0 0
    %642 = vmatpush1.bf16.msra.mxu0 0
    %643 = vmatprep.subr.bf16.mxu0 0
    %644 = vmatpush1.bf16.msra.mxu0 0
    %645 = vmatprep.subr.bf16.mxu0 0
    %646 = vmatpush1.bf16.msra.mxu0 0
    %647 = vmatprep.subr.bf16.mxu0 0
    %648 = vmatpush1.bf16.msra.mxu0 0
    %649 = vmatprep.subr.bf16.mxu0 0
    %650 = vmatpush1.bf16.msra.mxu0 0
    %651 = vmatprep.subr.bf16.mxu0 0
    %652 = vmatpush1.bf16.msra.mxu0 %v35
    %653 = vmatprep.subr.bf16.mxu0 0
    %654 = vmatpush1.bf16.msra.mxu0 %v34
    %655 = vmatprep.subr.bf16.mxu0 0
    %656 = vmatpush2.bf16.msra.mxu0 0
    %657 = vmatprep.subr.bf16.mxu0 0
    %658 = vmatpush2.bf16.msra.mxu0 0
    %659 = vmatprep.subr.bf16.mxu0 0
    %660 = vmatpush2.bf16.msra.mxu0 0
    %661 = vmatprep.subr.bf16.mxu0 0
    %662 = vmatpush2.bf16.msra.mxu0 0
    %663 = vmatprep.subr.bf16.mxu0 0
    %664 = vmatpush2.bf16.msra.mxu0 0
    %665 = vmatprep.subr.bf16.mxu0 0
    %666 = vmatpush2.bf16.msra.mxu0 0
    %667 = vmatprep.subr.bf16.mxu0 0
    %668 = vmatpush2.bf16.msra.mxu0 0
    %669 = vmatprep.subr.bf16.mxu0 0
    %670 = vmatpush2.bf16.msra.mxu0 0
    %671 = vmatprep.mubr.bf16.mxu0 0
    %672 = vmatmul.mubr.bf16.gmra.mxu0 %v637
    %v673 = vpop.f32.mrf.mxu0
    %v674 = vadd.f32 0.0, %v673
    %v675 = vpop.f32.mrf.mxu0
    %v676 = vpop.f32.mrf.mxu0
    %v677 = vpop.f32.mrf.mxu0
    %678 = vdwg.mxu0
    %s679 = scalar_lea.vmem %s0, 14
    %v680 = vld [vmem:[%s679] sm:$0x3]
    %v681 = vadd.f32 %v680, %v674
    %v682 = vxor.u32 %v681, 2147483648
    %v683 = vmul.f32 %v682, 1.442695
    %v684 = vpow.pop %v683
    %v685 = vadd.f32 %v684, 1.0
    %v686 = vrcp.pop %v685
    %v687 = vmul.f32 1.0, %v686
    %v688 = vadd.f32 %v674, %v91
    %690 = vrot.lane.b32.xlu0 %v688, 64
    %v691 = vpop.permute.xlu0 %690
    %v693 = vmul.f32 %v687, %v691
    %695 = vrot.lane.b32.xlu0 %v693, 64
    %v696 = vpop.permute.xlu0 %695
    %v698 = vadd.f32 %v680, %v696
    %v699 = vtanh.pop %v698
    %v700 = vsub.f32 %v625, %v699
    %702 = vrot.lane.b32.xlu0 %v700, 96
    %v703 = vpop.permute.xlu0 %702
    %v705 = vmul.f32 %v687, %v703
    %707 = vrot.lane.b32.xlu0 %v705, 32
    %v708 = vpop.permute.xlu0 %707
    %v710 = vadd.f32 %v699, %v708
    %712 = vrot.lane.b32.xlu0 %v710, 64
    %v713 = vpop.permute.xlu0 %712
    %s715 = scalar_lea.vmem [#allocation2], 14
    %716 = vst.msk [vmem:[%s715] sm:$0x3] %vm120, %v713
    // Predicated region
    $region14: #{gru_forward.1} parent=1 // pred_check
      _
    $region15: #{gru_forward.1} parent=1 // pred_check_branch
      %718 = sbr.rel (0) target = $region17
    $region16: #{gru_forward.1} parent=1 // pred_region
      %s720 = ssub.s32 256, 256
      %721 = vsyncadd [#allocation3], %s720
      %s722 = sshll.u32 [#allocation2], 4
      %s723 = int_to_ptr.vmem [resolvable:$true] %s722
      %728 = dma.vmem_to_hbm [thread:$0]  %s723, 256, %s3, [#allocation3], 32, 32, 2
    $region17: #{gru_forward.1} parent=1 // pred_fallthru
      _
    // Predicated region
    $region18: #{gru_forward.1} parent=1 // pred_check
      _
    $region19: #{gru_forward.1} parent=1 // pred_check_branch
      %730 = sbr.rel (0) target = $region21
    $region20: #{gru_forward.1} parent=1 // pred_region
      %731 = dma.done [#allocation3], 256
    $region21: #{gru_forward.1} parent=1 // pred_fallthru
      _
    %732 = vsyncpa [#allocation3], 1

</llo_original>
